<compile_context>
chip_gen: v5e
topology: v5e:2x2
jax: 0.10.0
libtpu: 0.0.40
codegen_flags: <defaults>
</compile_context>

<pallas_src>
import functools

import jax
import jax.numpy as jnp
from jax import lax
from jax.experimental import pallas as pl
from jax.experimental.pallas import tpu as pltpu

_LANE = 128
_SUBLANE = 8


def _round_up(x, m):
    return -(-x // m) * m


def _sublane_multiple(dtype):
    itemsize = jnp.dtype(dtype).itemsize
    if itemsize >= 4:
        return 8
    if itemsize == 2:
        return 16
    return 32


def _vmem_capacity_bytes():
    # Generation-aware VMEM capacity (v5e/v6e: 128 MiB, v7x: 64 MiB per TC).
    try:
        info = pltpu.get_tpu_info()
        cap = getattr(info, "vmem_capacity_bytes", None)
        if cap:
            return int(cap)
    except Exception:
        pass
    return 64 * 1024 * 1024  # conservative fallback (v7x-sized)


def _gcn2_kernel(x_ref, w_ref, o_ref, *, aggr_method, num_neighbors, apply_relu):
    # x_ref: (K, TILE_N, D)   neighbors x node-tile x input_dim (true D, no padding)
    # w_ref: (D, H_PAD)       resident weight tile
    # o_ref: (TILE_N, H_PAD)
    tile_n, d = x_ref.shape[1], x_ref.shape[2]

    if aggr_method in ("mean", "sum"):
        init = jnp.zeros((tile_n, d), jnp.float32)
        combine = lambda acc, x: acc + x
    elif aggr_method == "max":
        init = jnp.full((tile_n, d), -jnp.inf, jnp.float32)
        combine = jnp.maximum
    else:
        raise ValueError(f"Unknown aggr type: {aggr_method}")

    # Streamed K-reduction into one (TILE_N, D) f32 accumulator. Partial unroll keeps
    # LLO scheduling visibility without vreg-pressure blowup at large K.
    def body(k, acc):
        return combine(acc, x_ref[k].astype(jnp.float32))

    aggr = lax.fori_loop(0, num_neighbors, body, init,
                         unroll=min(num_neighbors, 8))

    # Native MXU operand dtypes: for bf16 weights cast the accumulator down instead of
    # upcasting W to f32 (f32 accumulation via preferred_element_type either way).
    if jnp.dtype(w_ref.dtype) == jnp.float32:
        lhs = aggr
    else:
        lhs = aggr.astype(w_ref.dtype)
    out = jnp.dot(lhs, w_ref[...], preferred_element_type=jnp.float32)

    if aggr_method == "mean":
        # Apply 1/K to the (TILE_N, H) result rather than the (TILE_N, D) aggregate.
        out = out * (1.0 / num_neighbors)
    if apply_relu:
        out = jnp.maximum(out, 0.0)
    o_ref[...] = out.astype(o_ref.dtype)


def _choose_tile_n(k, d, h_pad, x_dtype, w_dtype, n, vmem_cap):
    x_isz = jnp.dtype(x_dtype).itemsize
    w_isz = jnp.dtype(w_dtype).itemsize
    sub = _sublane_multiple(x_dtype)
    d_lane = _round_up(d, _LANE)  # lane-layout footprint in VMEM (not DMA bytes)

    budget = int(0.4 * vmem_cap)
    fixed = 2 * _round_up(d, _SUBLANE) * h_pad * w_isz     # double-buffered resident W
    per_row = (2 * k * d_lane * x_isz                      # double-buffered x tile
               + 2 * h_pad * x_isz                         # double-buffered out tile
               + d_lane * 4)                               # f32 accumulator
    max_rows = max(sub, (budget - fixed) // per_row)
    tile = min(2048, int(max_rows))

    # v7x megacore: keep at least 2 node tiles so both TensorCores get balanced work.
    if n >= 2 * sub:
        tile = min(tile, _round_up(-(-n // 2), sub))

    tile = max(sub, (tile // sub) * sub)
    tile = min(tile, _round_up(n, sub))
    return tile


def gcn2_forward(neighbor_node_features, weight, *, aggr_method="mean",
                 apply_relu=True, tile_n=None):
    """neighbor_node_features: (K, N, D); weight: (D, H) -> relu(aggr(K) @ W): (N, H)."""
    K, N, D = neighbor_node_features.shape
    D2, H = weight.shape
    assert D == D2

    x_dtype = neighbor_node_features.dtype
    w_dtype = weight.dtype
    x_isz = jnp.dtype(x_dtype).itemsize
    w_isz = jnp.dtype(w_dtype).itemsize

    # Only the (tiny) weight is padded: lane-dense output stores. x is streamed at its
    # true shape — no extra HBM pass, no D inflation.
    h_pad = _round_up(H, _LANE)
    w = weight
    if h_pad != H:
        w = jnp.pad(w, ((0, 0), (0, h_pad - H)))

    vmem_cap = _vmem_capacity_bytes()
    if tile_n is None:
        tile_n = _choose_tile_n(K, D, h_pad, x_dtype, w_dtype, N, vmem_cap)

    grid = (pl.cdiv(N, tile_n),)

    # VMEM footprint estimate (lane-padded layout) -> generation-aware vmem limit.
    d_lane = _round_up(D, _LANE)
    needed = (2 * _round_up(D, _SUBLANE) * h_pad * w_isz
              + tile_n * (2 * K * d_lane * x_isz + 2 * h_pad * x_isz + d_lane * 4))
    vmem_limit = int(min(max(needed + (8 << 20), 32 << 20), int(0.7 * vmem_cap)))

    cost = pl.CostEstimate(
        flops=int(2 * N * D * H + K * N * D),
        transcendentals=0,
        bytes_accessed=int(K * N * D * x_isz + D * h_pad * w_isz + N * h_pad * x_isz),
    )

    kernel = functools.partial(
        _gcn2_kernel, aggr_method=aggr_method, num_neighbors=K, apply_relu=apply_relu)

    out = pl.pallas_call(
        kernel,
        out_shape=jax.ShapeDtypeStruct((N, h_pad), x_dtype),
        grid_spec=pltpu.PrefetchScalarGridSpec(
            num_scalar_prefetch=0,
            grid=grid,
            in_specs=[
                # Last dim equals the full array dim D -> legal block without padding.
                pl.BlockSpec((K, tile_n, D), lambda i: (0, i, 0)),
                # Same block index every step -> W stays resident, no re-DMA.
                pl.BlockSpec((D, h_pad), lambda i: (0, 0)),
            ],
            # Tail block may hang off the N edge; OOB rows are masked on writeback and
            # each row's result depends only on its own rows, so valid rows are exact.
            out_specs=pl.BlockSpec((tile_n, h_pad), lambda i: (i, 0)),
        ),
        compiler_params=pltpu.CompilerParams(
            dimension_semantics=("parallel",),   # v7x: shard node tiles across 2 TCs
            vmem_limit_bytes=vmem_limit,
        ),
        cost_estimate=cost,
    )(neighbor_node_features, w)
    return out[:, :H]


def kaiming_uniform_init(key, shape, dtype=jnp.float32):
    # Mimic torch.nn.init.kaiming_uniform_ on a 2-D (input_dim, output_dim) tensor:
    # fan_in = shape[1], gain = sqrt(2) (a=0, leaky_relu), bound = gain * sqrt(3/fan_in).
    fan_in = shape[1]
    bound = float(jnp.sqrt(2.0) * jnp.sqrt(3.0 / fan_in))
    return jax.random.uniform(key, shape, dtype, minval=-bound, maxval=bound)


if __name__ == "__main__":
    key = jax.random.PRNGKey(0)
    k_x, k_w = jax.random.split(key)

    num_neighbors, num_nodes, input_dim, hidden_dim = 8, 16, 32, 16

    neighbor_node_features = jax.random.normal(
        k_x, (num_neighbors, num_nodes, input_dim), dtype=jnp.float32)
    weight = kaiming_uniform_init(k_w, (input_dim, hidden_dim))

    out = gcn2_forward(neighbor_node_features, weight,
                       aggr_method="mean", apply_relu=True)
    out = jax.block_until_ready(out)

    # Pure-JAX reference for GCN2.forward (mean aggregation + F.relu activation).
    ref = jnp.maximum(jnp.mean(neighbor_node_features, axis=0) @ weight, 0.0)
    assert out.shape == (num_nodes, hidden_dim)
    assert jnp.allclose(out, ref, atol=1e-4, rtol=1e-4)

    print("KERNEL_OK")
</pallas_src>

<mosaic_0001>
module attributes {stable_mosaic.version = 11 : i64} {
  func.func @_gcn2_kernel(%arg0: i32, %arg1: memref<8x8x32xf32, #tpu.memory_space<vmem>>, %arg2: memref<32x128xf32, #tpu.memory_space<vmem>>, %arg3: memref<8x128xf32, #tpu.memory_space<vmem>>) attributes {dimension_semantics = [#tpu.dimension_semantics<parallel>], iteration_bounds = array<i64: 2>, scalar_prefetch = 0 : i64, scratch_operands = 0 : i64, tpu.core_type = #tpu.core_type<tc>, window_params = [{transform_indices = @transform_0, window_bounds = array<i64: 8, 8, 32>}, {pipeline_mode = #tpu.pipeline_mode<synchronous>, transform_indices = @transform_1, window_bounds = array<i64: 32, 128>}, {transform_indices = @transform_2, window_bounds = array<i64: 8, 128>}]} {
    %cst = arith.constant 0.000000e+00 : f32
    %0 = vector.broadcast %cst : f32 to vector<8x32xf32>
    %c0_i32 = arith.constant 0 : i32
    %1 = arith.index_cast %c0_i32 : i32 to index
    %c0 = arith.constant 0 : index
    %c0_0 = arith.constant 0 : index
    %2 = vector.load %arg1[%1, %c0, %c0_0] : memref<8x8x32xf32, #tpu.memory_space<vmem>>, vector<1x8x32xf32>
    %3 = vector.shape_cast %2 : vector<1x8x32xf32> to vector<8x32xf32>
    %4 = arith.addf %0, %3 : vector<8x32xf32>
    %c1_i32 = arith.constant 1 : i32
    %5 = arith.index_cast %c1_i32 : i32 to index
    %c0_1 = arith.constant 0 : index
    %c0_2 = arith.constant 0 : index
    %6 = vector.load %arg1[%5, %c0_1, %c0_2] : memref<8x8x32xf32, #tpu.memory_space<vmem>>, vector<1x8x32xf32>
    %7 = vector.shape_cast %6 : vector<1x8x32xf32> to vector<8x32xf32>
    %8 = arith.addf %4, %7 : vector<8x32xf32>
    %c2_i32 = arith.constant 2 : i32
    %9 = arith.index_cast %c2_i32 : i32 to index
    %c0_3 = arith.constant 0 : index
    %c0_4 = arith.constant 0 : index
    %10 = vector.load %arg1[%9, %c0_3, %c0_4] : memref<8x8x32xf32, #tpu.memory_space<vmem>>, vector<1x8x32xf32>
    %11 = vector.shape_cast %10 : vector<1x8x32xf32> to vector<8x32xf32>
    %12 = arith.addf %8, %11 : vector<8x32xf32>
    %c3_i32 = arith.constant 3 : i32
    %13 = arith.index_cast %c3_i32 : i32 to index
    %c0_5 = arith.constant 0 : index
    %c0_6 = arith.constant 0 : index
    %14 = vector.load %arg1[%13, %c0_5, %c0_6] : memref<8x8x32xf32, #tpu.memory_space<vmem>>, vector<1x8x32xf32>
    %15 = vector.shape_cast %14 : vector<1x8x32xf32> to vector<8x32xf32>
    %16 = arith.addf %12, %15 : vector<8x32xf32>
    %c4_i32 = arith.constant 4 : i32
    %17 = arith.index_cast %c4_i32 : i32 to index
    %c0_7 = arith.constant 0 : index
    %c0_8 = arith.constant 0 : index
    %18 = vector.load %arg1[%17, %c0_7, %c0_8] : memref<8x8x32xf32, #tpu.memory_space<vmem>>, vector<1x8x32xf32>
    %19 = vector.shape_cast %18 : vector<1x8x32xf32> to vector<8x32xf32>
    %20 = arith.addf %16, %19 : vector<8x32xf32>
    %c5_i32 = arith.constant 5 : i32
    %21 = arith.index_cast %c5_i32 : i32 to index
    %c0_9 = arith.constant 0 : index
    %c0_10 = arith.constant 0 : index
    %22 = vector.load %arg1[%21, %c0_9, %c0_10] : memref<8x8x32xf32, #tpu.memory_space<vmem>>, vector<1x8x32xf32>
    %23 = vector.shape_cast %22 : vector<1x8x32xf32> to vector<8x32xf32>
    %24 = arith.addf %20, %23 : vector<8x32xf32>
    %c6_i32 = arith.constant 6 : i32
    %25 = arith.index_cast %c6_i32 : i32 to index
    %c0_11 = arith.constant 0 : index
    %c0_12 = arith.constant 0 : index
    %26 = vector.load %arg1[%25, %c0_11, %c0_12] : memref<8x8x32xf32, #tpu.memory_space<vmem>>, vector<1x8x32xf32>
    %27 = vector.shape_cast %26 : vector<1x8x32xf32> to vector<8x32xf32>
    %28 = arith.addf %24, %27 : vector<8x32xf32>
    %c7_i32 = arith.constant 7 : i32
    %29 = arith.index_cast %c7_i32 : i32 to index
    %c0_13 = arith.constant 0 : index
    %c0_14 = arith.constant 0 : index
    %30 = vector.load %arg1[%29, %c0_13, %c0_14] : memref<8x8x32xf32, #tpu.memory_space<vmem>>, vector<1x8x32xf32>
    %31 = vector.shape_cast %30 : vector<1x8x32xf32> to vector<8x32xf32>
    %32 = arith.addf %28, %31 : vector<8x32xf32>
    %c8_i32 = arith.constant 8 : i32
    %c0_15 = arith.constant 0 : index
    %c0_16 = arith.constant 0 : index
    %33 = vector.load %arg2[%c0_15, %c0_16] : memref<32x128xf32, #tpu.memory_space<vmem>>, vector<32x128xf32>
    %cst_17 = arith.constant dense<0.000000e+00> : vector<8x128xf32>
    %34 = tpu.matmul %32, %33, %cst_17 {dimension_numbers = #tpu.dot_dimension_numbers<[1], [0], [0], [1], [0, 0, 1, 1], [], []>} : vector<8x32xf32>, vector<32x128xf32>, vector<8x128xf32> -> vector<8x128xf32>
    %cst_18 = arith.constant 1.250000e-01 : f32
    %35 = vector.broadcast %cst_18 : f32 to vector<8x128xf32>
    %36 = arith.mulf %34, %35 : vector<8x128xf32>
    %cst_19 = arith.constant 0.000000e+00 : f32
    %37 = vector.broadcast %cst_19 : f32 to vector<8x128xf32>
    %38 = arith.maximumf %36, %37 : vector<8x128xf32>
    %c0_20 = arith.constant 0 : index
    %c0_21 = arith.constant 0 : index
    %39 = vector.load %arg3[%c0_20, %c0_21] : memref<8x128xf32, #tpu.memory_space<vmem>>, vector<8x128xf32>
    tpu.vector_store %arg3[%c0_20, %c0_21], %38 {strides = array<i32>} : memref<8x128xf32, #tpu.memory_space<vmem>>, vector<8x128xf32>,
    return
  }
  func.func @transform_0(%arg0: i32) -> (i32, i32, i32) {
    %c0_i32 = arith.constant 0 : i32
    %c0_i32_0 = arith.constant 0 : i32
    %c0_i32_1 = arith.constant 0 : i32
    return %c0_i32, %arg0, %c0_i32_0 : i32, i32, i32
  }
  func.func @transform_1(%arg0: i32) -> (i32, i32) {
    %c0_i32 = arith.constant 0 : i32
    %c0_i32_0 = arith.constant 0 : i32
    %c0_i32_1 = arith.constant 0 : i32
    return %c0_i32, %c0_i32_0 : i32, i32
  }
  func.func @transform_2(%arg0: i32) -> (i32, i32) {
    %c0_i32 = arith.constant 0 : i32
    %c0_i32_0 = arith.constant 0 : i32
    return %arg0, %c0_i32 : i32, i32
  }
}

</mosaic_0001>

<llo_original>
// kernel: tpu_custom_call.1
$region0: #{tpu_custom_call.1}
  #allocation0 [shape = 'u32[]', space=smem, size = 0x4, offset = 0x4, fixed_abs, tag = 'smem constant byte address 0x4 - core index']
  #allocation1 [shape = 'u32[72,128]{1,0:T(1,128)}', space=vmem, size = 0x9000, scoped, tag = 'internal scratch']
  %s0 = inlined_call_operand.hbm [shape: f32[8,16,32], index: 0, kind: input, shape index: {}]
  %s1 = inlined_call_operand.hbm [shape: f32[32,128], index: 1, kind: input, shape index: {}]
  %s2 = inlined_call_operand.hbm [shape: f32[16,128], index: 2, kind: output, shape index: {}]
  %s3 = sld [smem:[#allocation0]]
  $region49: #{tpu_custom_call.1} parent=0
    _
  %s5 = ssub.s32 1, %s3
  %s6 = scalar_select 0, %s5, %s3
  $region1: #{tpu_custom_call.1} parent=0
    #allocation2 [shape = 'u8[65536]{0}', space=vmem, size = 0x10000, scoped, tag = 'input window, operand 0']
    #allocation3 [shape = 's32[2]{0}', space=sflag, size = 0x8, scoped, tag = 'scoped memory for tpu_custom_call.1']
    #allocation4 [shape = 's32[2]{0}', space=sflag, size = 0x8, scoped, tag = 'scoped memory for tpu_custom_call.1']
    #allocation5 [shape = 'u8[16384]{0}', space=vmem, size = 0x4000, scoped, tag = 'input window, operand 1, single buffered']
    #allocation6 [shape = 's32[1]{0}', space=sflag, size = 0x4, scoped, tag = 'scoped memory for tpu_custom_call.1']
    #allocation7 [shape = 'u8[8192]{0}', space=vmem, size = 0x2000, scoped, tag = 'output window, operand 0']
    %7 = vsyncpa [#allocation3], 0
    %s8 = scalar_lea.sflag [#allocation3], 1
    %9 = vsyncpa %s8, 0
    %10 = vsyncpa [#allocation6], 0
    %11 = vsyncpa [#allocation4], 0
    %s12 = scalar_lea.sflag [#allocation4], 1
    %13 = vsyncpa %s12, 0
    loop: start=0, step=1, limit=4
    $region2: #{tpu_custom_call.1} parent=1 // loop_pre_header
      _
    $region3: #{tpu_custom_call.1} parent=1 // loop_header
      %s15 = sphi 0, %s19
      %p16 = scmp.ge.s32.totalorder %s15, 4
      %s25 = sphi 0, %s27
      %s28 = sphi 0, %s25
      %s29 = sphi 0, %s28
      %s45 = sphi 0, %s29
      %s49 = sphi 0, %s49
      %s51 = sphi 0, %s49
      %s52 = sphi 0, %s51
      %s66 = sphi 0, %s52
      %s72 = sphi 0, %s74
      %s75 = sphi 0, %s72
      %s76 = sphi 0, %s75
      %s92 = sphi 0, %s76
    $region4: #{tpu_custom_call.1} parent=1 // loop_header_branch
      %18 = sbr.rel (%p16) target = $region8
    $region5: #{tpu_custom_call.1} parent=1 // loop_body
      %s20 = ssub.s32 %s15, 1
      %s21 = ssub.s32 %s15, 2
      %s22 = sadd.s32 %s15, 1
      %s23 = ssub.s32 %s15, %s22
      %p24 = scmp.eq.s32.totalorder %s23, 0
      %s26 = sadd.s32 %s25, 1
      %s27 = scalar_select %p24, %s25, %s26
      %p30 = pneg %p24
      %p31 = scmp.eq.s32.totalorder %s15, 1
      %p32 = por %p30, %p31
      %p33 = scmp.ne.s32.totalorder %s25, %s28
      %p34 = scmp.eq.s32.totalorder %s15, 0
      %p35 = por %p33, %p34
      %p36 = scmp.ne.s32.totalorder %s25, %s28
      %p37 = scmp.eq.s32.totalorder %s20, 1
      %p38 = por %p36, %p37
      %p39 = scmp.ne.s32.totalorder %s28, %s29
      %p40 = scmp.eq.s32.totalorder %s20, 0
      %p41 = por %p39, %p40
      %p42 = scmp.ne.s32.totalorder %s28, %s29
      %p43 = scmp.eq.s32.totalorder %s21, 1
      %p44 = por %p42, %p43
      %p46 = scmp.ne.s32.totalorder %s29, %s45
      %p47 = scmp.eq.s32.totalorder %s21, 0
      %p48 = por %p46, %p47
      %s50 = sadd.s32 %s49, 1
      %p53 = scmp.eq.s32.totalorder %s15, 1
      %p54 = scmp.ne.s32.totalorder %s49, %s51
      %p55 = scmp.eq.s32.totalorder %s15, 0
      %p56 = por %p54, %p55
      %p57 = scmp.ne.s32.totalorder %s49, %s51
      %p58 = scmp.eq.s32.totalorder %s20, 1
      %p59 = por %p57, %p58
      %p60 = scmp.ne.s32.totalorder %s51, %s52
      %p61 = scmp.eq.s32.totalorder %s20, 0
      %p62 = por %p60, %p61
      %p63 = scmp.ne.s32.totalorder %s51, %s52
      %p64 = scmp.eq.s32.totalorder %s21, 1
      %p65 = por %p63, %p64
      %p67 = scmp.ne.s32.totalorder %s52, %s66
      %p68 = scmp.eq.s32.totalorder %s21, 0
      %p69 = por %p67, %p68
      %s70 = ssub.s32 %s15, %s22
      %p71 = scmp.eq.s32.totalorder %s70, 0
      %s73 = sadd.s32 %s72, 1
      %s74 = scalar_select %p71, %s72, %s73
      %p77 = pneg %p71
      %p78 = scmp.eq.s32.totalorder %s15, 1
      %p79 = por %p77, %p78
      %p80 = scmp.ne.s32.totalorder %s72, %s75
      %p81 = scmp.eq.s32.totalorder %s15, 0
      %p82 = por %p80, %p81
      %p83 = scmp.ne.s32.totalorder %s72, %s75
      %p84 = scmp.eq.s32.totalorder %s20, 1
      %p85 = por %p83, %p84
      %p86 = scmp.ne.s32.totalorder %s75, %s76
      %p87 = scmp.eq.s32.totalorder %s20, 0
      %p88 = por %p86, %p87
      %p89 = scmp.ne.s32.totalorder %s75, %s76
      %p90 = scmp.eq.s32.totalorder %s21, 1
      %p91 = por %p89, %p90
      %p93 = scmp.ne.s32.totalorder %s76, %s92
      %p94 = scmp.eq.s32.totalorder %s21, 0
      %p95 = por %p93, %p94
      %p96 = scmp.le.s32.totalorder 1, %s15
      %p97 = scmp.lt.s32.totalorder %s15, 3
      %p98 = pnand %p96, %p97
      %p99 = pneg %p98
      // Predicated region
      $region9: #{tpu_custom_call.1} parent=5 // pred_check
        _
      $region10: #{tpu_custom_call.1} parent=5 // pred_check_branch
        %101 = sbr.rel (%p98) target = $region12
      $region11: #{tpu_custom_call.1} parent=5 // pred_region
        %s102 = ssub.s32 %s15, 1
        // Predicated region
        $region13: #{tpu_custom_call.1} parent=11 // pred_check
          %p103 = pneg %p62
        $region14: #{tpu_custom_call.1} parent=11 // pred_check_branch
          %105 = sbr.rel (%p103) target = $region16
        $region15: #{tpu_custom_call.1} parent=11 // pred_region
          %107 = vsyncadd [#allocation6], 0
          %s108 = sshll.u32 %s1, 4
          %s109 = int_to_ptr.hbm [resolvable:$true] %s108
          %s110 = sshll.u32 [#allocation5], 4
          %s111 = int_to_ptr.vmem [resolvable:$true] %s110
          %116 = dma.hbm_to_vmem [thread:$0]  %s109, 512, %s111, [#allocation6], 128, 128, 8
        $region16: #{tpu_custom_call.1} parent=11 // pred_fallthru
          _
      $region12: #{tpu_custom_call.1} parent=5 // pred_fallthru
        _
      %p117 = scmp.lt.s32.totalorder %s15, 2
      // Predicated region
      $region17: #{tpu_custom_call.1} parent=5 // pred_check
        %p118 = pneg %p117
      $region18: #{tpu_custom_call.1} parent=5 // pred_check_branch
        %120 = sbr.rel (%p118) target = $region20
      $region19: #{tpu_custom_call.1} parent=5 // pred_region
        // Predicated region
        $region21: #{tpu_custom_call.1} parent=19 // pred_check
          %p121 = pneg %p35
        $region22: #{tpu_custom_call.1} parent=19 // pred_check_branch
          %123 = sbr.rel (%p121) target = $region24
        $region23: #{tpu_custom_call.1} parent=19 // pred_region
          %s124 = sand.u32 %s25, 1
          %s125 = scalar_lea.sflag [#allocation3], %s124
          %s126 = sand.u32 %s25, 1
          %s127 = smul.addr %s126, 64
          %s128 = scalar_lea.vmem [#allocation2], %s127
          %130 = vsyncadd %s125, 0
          %s131 = smul.addr %s15, 8
          %s132 = scalar_lea.hbm %s0, %s131
          %s133 = sshll.u32 %s132, 4
          %s134 = int_to_ptr.hbm [resolvable:$true] %s133
          %s135 = sshll.u32 %s128, 4
          %s136 = int_to_ptr.vmem [resolvable:$true] %s135
          %141 = dma.hbm_to_vmem [thread:$0]  %s134, 1024, %s136, %s125, 256, 128, 8
        $region24: #{tpu_custom_call.1} parent=19 // pred_fallthru
          _
      $region20: #{tpu_custom_call.1} parent=5 // pred_fallthru
        _
      %p142 = scmp.le.s32.totalorder 1, %s15
      %p143 = scmp.lt.s32.totalorder %s15, 3
      %p144 = pnand %p142, %p143
      %p145 = pneg %p144
      // Predicated region
      $region25: #{tpu_custom_call.1} parent=5 // pred_check
        _
      $region26: #{tpu_custom_call.1} parent=5 // pred_check_branch
        %147 = sbr.rel (%p144) target = $region28
      $region27: #{tpu_custom_call.1} parent=5 // pred_region
        %s148 = ssub.s32 %s15, 1
        %s149 = sand.u32 %s28, 1
        %s150 = scalar_lea.sflag [#allocation3], %s149
        %s151 = sand.u32 %s28, 1
        %s152 = smul.addr %s151, 64
        %s153 = scalar_lea.vmem [#allocation2], %s152
        // Predicated region
        $region29: #{tpu_custom_call.1} parent=27 // pred_check
          %p154 = pneg %p41
        $region30: #{tpu_custom_call.1} parent=27 // pred_check_branch
          %156 = sbr.rel (%p154) target = $region32
        $region31: #{tpu_custom_call.1} parent=27 // pred_region
          %158 = dma.done %s150, 1024
        $region32: #{tpu_custom_call.1} parent=27 // pred_fallthru
          _
        // Predicated region
        $region33: #{tpu_custom_call.1} parent=27 // pred_check
          %p159 = pneg %p62
        $region34: #{tpu_custom_call.1} parent=27 // pred_check_branch
          %161 = sbr.rel (%p159) target = $region36
        $region35: #{tpu_custom_call.1} parent=27 // pred_region
          %163 = dma.done [#allocation6], 512
        $region36: #{tpu_custom_call.1} parent=27 // pred_fallthru
          _
        %s164 = sand.u32 %s28, 1
        %s165 = scalar_lea.sflag [#allocation3], %s164
        %s166 = sand.u32 %s28, 1
        %s167 = smul.addr %s166, 64
        %s168 = scalar_lea.vmem [#allocation2], %s167
        %p169 = pneg %p41
        %p170 = pneg %p38
        %p171 = pneg %p62
        %p172 = pneg %p59
        %p173 = pneg %p88
        %p174 = pneg %p85
        %s175 = sand.u32 %s75, 1
        %s176 = scalar_lea.sflag [#allocation4], %s175
        %s177 = sand.u32 %s75, 1
        %s178 = smul.addr %s177, 8
        %s179 = scalar_lea.vmem [#allocation7], %s178
        %v180 = vld [vmem:[%s153] sm:$0xff]
        %v181 = vadd.f32 %v180, 0.0
        %s182 = scalar_lea.vmem %s153, 8 [#allocation2]
        %v183 = vld [vmem:[%s182] sm:$0xff]
        %v184 = vadd.f32 %v181, %v183
        %s185 = scalar_lea.vmem %s153, 16 [#allocation2]
        %v186 = vld [vmem:[%s185] sm:$0xff]
        %v187 = vadd.f32 %v184, %v186
        %s188 = scalar_lea.vmem %s153, 24 [#allocation2]
        %v189 = vld [vmem:[%s188] sm:$0xff]
        %v190 = vadd.f32 %v187, %v189
        %s191 = scalar_lea.vmem %s153, 32 [#allocation2]
        %v192 = vld [vmem:[%s191] sm:$0xff]
        %v193 = vadd.f32 %v190, %v192
        %s194 = scalar_lea.vmem %s153, 40 [#allocation2]
        %v195 = vld [vmem:[%s194] sm:$0xff]
        %v196 = vadd.f32 %v193, %v195
        %s197 = scalar_lea.vmem %s153, 48 [#allocation2]
        %v198 = vld [vmem:[%s197] sm:$0xff]
        %v199 = vadd.f32 %v196, %v198
        %s200 = scalar_lea.vmem %s153, 56 [#allocation2]
        %v201 = vld [vmem:[%s200] sm:$0xff]
        %v202 = vadd.f32 %v199, %v201
        %v203 = vld [vmem:[#allocation5] sm:$0xff]
        %v204 = vld [vmem:[#allocation5 + $0x8] sm:$0xff]
        %v205 = vld [vmem:[#allocation5 + $0x10] sm:$0xff]
        %v206 = vld [vmem:[#allocation5 + $0x18] sm:$0xff]
        %vm207 = vcmask 261120
        %v209 = vsel %vm207, %v202, 0
        %211 = vmatpush.msra.mxu0 0.0
        %212 = vmatpush.msra.mxu0 0.0
        %213 = vmatpush.msra.mxu0 0.0
        %214 = vmatpush.msra.mxu0 0.0
        %215 = vmatpush.msra.mxu0 0.0
        %216 = vmatpush.msra.mxu0 0.0
        %217 = vmatpush.msra.mxu0 0.0
        %218 = vmatpush.msra.mxu0 0.0
        %219 = vmatpush.msra.mxu0 0.0
        %220 = vmatpush.msra.mxu0 0.0
        %221 = vmatpush.msra.mxu0 0.0
        %222 = vmatpush.msra.mxu0 0.0
        %223 = vmatpush.msra.mxu0 %v206
        %224 = vmatpush.msra.mxu0 %v205
        %225 = vmatpush.msra.mxu0 %v204
        %226 = vmatpush.msra.mxu0 %v203
        %227 = vmatmul.f32.gmra.mxu0 %v209
        %v228 = vpop.f32.mrf.mxu0
        %v229 = vadd.f32 0.0, %v228
        %230 = vdwg.mxu0
        %v231 = vmul.f32 %v229, 0.125
        %v232 = vmax.f32 %v231, 0.0
        %233 = vst [vmem:[%s179] sm:$0xff] %v232
        %s234 = sand.u32 %s75, 1
        %s235 = scalar_lea.sflag [#allocation4], %s234
        %s236 = sand.u32 %s75, 1
        %s237 = smul.addr %s236, 8
        %s238 = scalar_lea.vmem [#allocation7], %s237
        // Predicated region
        $region37: #{tpu_custom_call.1} parent=27 // pred_check
          %p239 = pneg %p85
        $region38: #{tpu_custom_call.1} parent=27 // pred_check_branch
          %241 = sbr.rel (%p239) target = $region40
        $region39: #{tpu_custom_call.1} parent=27 // pred_region
          %243 = vsyncadd %s235, 0
          %s244 = smul.addr %s20, 8
          %s245 = scalar_lea.hbm %s2, %s244
          %s247 = sshll.u32 %s238, 4
          %s248 = int_to_ptr.vmem [resolvable:$true] %s247
          %s249 = sshll.u32 %s245, 4
          %s250 = int_to_ptr.hbm [resolvable:$true] %s249
          %252 = dma.vmem_to_hbm [thread:$0]  %s248, 128, %s250, %s235
        $region40: #{tpu_custom_call.1} parent=27 // pred_fallthru
          _
      $region28: #{tpu_custom_call.1} parent=5 // pred_fallthru
        _
      %p253 = scmp.le.s32.totalorder 2, %s15
      // Predicated region
      $region41: #{tpu_custom_call.1} parent=5 // pred_check
        %p254 = pneg %p253
      $region42: #{tpu_custom_call.1} parent=5 // pred_check_branch
        %256 = sbr.rel (%p254) target = $region44
      $region43: #{tpu_custom_call.1} parent=5 // pred_region
        %s257 = ssub.s32 %s15, 2
        // Predicated region
        $region45: #{tpu_custom_call.1} parent=43 // pred_check
          %p258 = pneg %p91
        $region46: #{tpu_custom_call.1} parent=43 // pred_check_branch
          %260 = sbr.rel (%p258) target = $region48
        $region47: #{tpu_custom_call.1} parent=43 // pred_region
          %s261 = sand.u32 %s76, 1
          %s262 = scalar_lea.sflag [#allocation4], %s261
          %s263 = sand.u32 %s76, 1
          %s264 = smul.addr %s263, 8
          %s265 = scalar_lea.vmem [#allocation7], %s264
          %267 = dma.done %s262, 128
        $region48: #{tpu_custom_call.1} parent=43 // pred_fallthru
          _
      $region44: #{tpu_custom_call.1} parent=5 // pred_fallthru
        _
    $region6: #{tpu_custom_call.1} parent=1 // loop_footer
      %s19 = sadd.s32 1, %s15
    $region7: #{tpu_custom_call.1} parent=1 // loop_footer_branch
      %14 = sbr.rel target = $region3
    $region8: #{tpu_custom_call.1} parent=1 // loop_exit
      _
    %268 = vsyncpa [#allocation3], 1
    %s269 = scalar_lea.sflag [#allocation3], 1
    %270 = vsyncpa %s269, 1
    %271 = vsyncpa [#allocation6], 1
    %272 = vsyncpa [#allocation4], 1
    %s273 = scalar_lea.sflag [#allocation4], 1
    %274 = vsyncpa %s273, 1

</llo_original>
